<compile_context>
chip_gen: v6e
topology: v6e:2x2x1
jax: 0.10.0
libtpu: 0.0.40
codegen_flags: <defaults>
</compile_context>

<pallas_src>
import jax
import jax.numpy as jnp
from jax import lax
from jax.experimental import pallas as pl
from jax.experimental.pallas import tpu as pltpu


# ----------------------------------------------------------------------------
# helpers
# ----------------------------------------------------------------------------
def _vmem_capacity_bytes(default=64 << 20):
    """Physical VMEM per core; conservative (v7x, 64 MiB) default if query fails."""
    try:
        return int(pltpu.get_tpu_info().vmem_capacity_bytes)
    except Exception:
        return default


# ----------------------------------------------------------------------------
# Kernel 1: per-edge squared-norm score (the 'norm' ordering criterion)
#   out[b, 0, e] = sum_c fe[b, c, e]^2
# ----------------------------------------------------------------------------
def _edge_sqnorm_kernel(fe_ref, out_ref):
    x = fe_ref[...].astype(jnp.float32)
    out_ref[...] = jnp.sum(x * x, axis=1, keepdims=True)


def edge_sqnorm(fe, *, whole_block_budget=8 << 20):
    B, C, E = fe.shape
    out_shape = jax.ShapeDtypeStruct((B, 1, E), jnp.float32)
    itemsize = jnp.dtype(fe.dtype).itemsize
    fe_bytes = B * C * E * itemsize
    cap = _vmem_capacity_bytes()

    # Small problems: one block / one grid step (per-step overhead would dominate
    # a tiled launch).  Gated on bytes, not on E alone.
    if fe_bytes + B * E * 4 <= min(whole_block_budget, cap // 4):
        return pl.pallas_call(_edge_sqnorm_kernel, out_shape=out_shape)(fe)

    # Tile the lane (edge) axis; fold B and C into each block so every grid step
    # moves >= ~1 MiB and output stores stay lane-dense.
    tile_budget = min(cap // 4, 32 << 20)
    per_lane = B * (C * itemsize + 4)           # fe column + f32 out column
    te, t = 0, 128
    while t <= E:
        if E % t == 0 and 2 * per_lane * t <= tile_budget:   # double-buffered
            te = t
        t += 128
    if te:
        return pl.pallas_call(
            _edge_sqnorm_kernel,
            out_shape=out_shape,
            grid=(E // te,),
            in_specs=[pl.BlockSpec((B, C, te), lambda n: (0, 0, n))],
            out_specs=pl.BlockSpec((B, 1, te), lambda n: (0, 0, n)),
            compiler_params=pltpu.CompilerParams(
                dimension_semantics=("parallel",)),
        )(fe)

    # Fallback (E not a multiple of 128): one mesh per grid step.
    return pl.pallas_call(
        _edge_sqnorm_kernel,
        out_shape=out_shape,
        grid=(B,),
        in_specs=[pl.BlockSpec((1, C, E), lambda b: (b, 0, 0))],
        out_specs=pl.BlockSpec((1, 1, E), lambda b: (b, 0, 0)),
        compiler_params=pltpu.CompilerParams(
            dimension_semantics=("parallel",)),
    )(fe)


# ----------------------------------------------------------------------------
# Kernel 2a (default): SPARSE pooling application.
#   pool_mat is identity + <=2 extra ones per pooled column, so
#     out[:, j]       = fe[:, j]                                    (colsum 1)
#     out[:, e_left]  = (fe[:,e_left]  + fe[:,del_left]  + fe[:,collapse]) / 3
#     out[:, e_right] = (fe[:,e_right] + fe[:,del_right] + fe[:,collapse]) / 3
#   Collapse index quintuples live in SMEM via scalar prefetch; no E x E matrix
#   is ever built.  Per collapse: 5 dynamic column loads + 2 dynamic column
#   stores (O(C) work), on top of a single lane-dense bulk copy of fe.
# ----------------------------------------------------------------------------
def _sparse_pool_kernel(idx_ref, fe_ref, out_ref):
    # idx_ref: SMEM (B, 5*K) int32  (collapse_e, e_left, e_right, del_left, del_right) * K
    # fe_ref / out_ref: VMEM (1, C, E) f32
    b = pl.program_id(0)
    n_collapse = idx_ref.shape[1] // 5
    third = jnp.float32(1.0 / 3.0)

    # Bulk pass-through: pool_mat is identity except for 2*K touched columns.
    out_ref[0] = fe_ref[0]

    def body(k, carry):
        base = 5 * k
        ce = idx_ref[b, base + 0]
        el = idx_ref[b, base + 1]
        er = idx_ref[b, base + 2]
        dl = idx_ref[b, base + 3]
        dr = idx_ref[b, base + 4]

        def col(j):                                  # (C, 1) dynamic lane load
            return fe_ref[0, :, pl.ds(j, 1)]

        c_ce = col(ce)
        new_left = (col(el) + col(dl) + c_ce) * third
        new_right = (col(er) + col(dr) + c_ce) * third
        out_ref[0, :, pl.ds(el, 1)] = new_left.astype(out_ref.dtype)
        out_ref[0, :, pl.ds(er, 1)] = new_right.astype(out_ref.dtype)
        return carry

    lax.fori_loop(0, n_collapse, body, 0, unroll=bool(n_collapse <= 8))


def pool_apply_sparse(fe, collapse_idx, n_collapse):
    # TODO(synk): for deep layers with C >= 128 a transposed (B, E, C) layout
    # (sublane-indexed gathers/scatters, lane-dense over C) and a second
    # "parallel" grid axis (v7x 2-TC) would be the next wins; not exercised at
    # these shapes.
    B, C, E = fe.shape
    assert collapse_idx.shape == (B, 5 * n_collapse)
    cap = _vmem_capacity_bytes()
    itemsize = jnp.dtype(fe.dtype).itemsize
    vmem_limit = int(min(max(4 * C * E * itemsize + (4 << 20), 8 << 20),
                         (cap * 7) // 8))
    grid_spec = pltpu.PrefetchScalarGridSpec(
        num_scalar_prefetch=1,
        grid=(B,),
        in_specs=[pl.BlockSpec((1, C, E), lambda b, idx: (b, 0, 0))],
        out_specs=pl.BlockSpec((1, C, E), lambda b, idx: (b, 0, 0)),
    )
    return pl.pallas_call(
        _sparse_pool_kernel,
        out_shape=jax.ShapeDtypeStruct((B, C, E), fe.dtype),
        grid_spec=grid_spec,
        compiler_params=pltpu.CompilerParams(
            dimension_semantics=("parallel",),
            vmem_limit_bytes=vmem_limit),
    )(collapse_idx.astype(jnp.int32), fe)


# ----------------------------------------------------------------------------
# Kernel 2b (fallback / general pool matrices): dense tiled matmul.
#   out = (fe @ pool_mat) / colsum(pool_mat), tiled over pool_mat columns.
#   pmat stays bf16 end-to-end (0/1 exact, native MXU path); colsum is an XLU
#   cross-sublane reduce; the divide is exact (colsum is a small integer).
# ----------------------------------------------------------------------------
def _pool_apply_kernel(fe_ref, pmat_ref, out_ref):
    # fe_ref:  (1, C, E)  bf16  (cast once on host; block constant across n)
    # pmat_ref:(1, E, TN) bf16  (entries exactly 0/1)
    # out_ref: (1, C, TN) f32
    fe = fe_ref[0]
    pmat = pmat_ref[0]
    pooled = jnp.dot(fe, pmat, preferred_element_type=jnp.float32)       # MXU bf16 path
    colsum = jnp.sum(pmat, axis=0, keepdims=True, dtype=jnp.float32)     # XLU, free filler
    out_ref[0] = (pooled / jnp.maximum(colsum, 1.0)).astype(out_ref.dtype)


def pool_apply(fe, pool_mats, *, max_col_tile=None):
    # TODO(synk): int8 pmat (v5e/v6e) / fp8 pmat (v7x) would halve the dominant
    # HBM stream again; kept bf16 here to stay on a universally supported
    # mixed-precision MXU path.
    B, C, E = fe.shape
    assert pool_mats.shape == (B, E, E)
    cap = _vmem_capacity_bytes()
    if max_col_tile is None:
        # bigger tiles on 128 MiB parts (v5e/v6e), tighter on v7x's 64 MiB
        max_col_tile = 1024 if cap >= (100 << 20) else 512

    # Pad the pooled-column axis to a multiple of 128 so the column tile is
    # always 128-aligned (never an untiled full-E pmat slab in VMEM).
    E_pad = ((E + 127) // 128) * 128
    pmat = pool_mats.astype(jnp.bfloat16)
    if E_pad != E:
        pmat = jnp.pad(pmat, ((0, 0), (0, 0), (0, E_pad - E)))
    fe_bf16 = fe.astype(jnp.bfloat16)

    # Column tile: largest multiple-of-128 divisor of E_pad whose double-buffered
    # bf16 pmat slab (the dominant stream) + out tiles fit the VMEM budget.
    fixed = 2 * C * E * 2 + (4 << 20)               # fe (bf16, dbl-buffered) + headroom
    tile_budget = min((cap * 7) // 8, 100 << 20) - fixed
    tn, t = 128, 128
    while t <= min(E_pad, max_col_tile):
        if E_pad % t == 0 and (2 * E * t * 2 + 2 * C * t * 4) <= tile_budget:
            tn = t
        t += 128

    vmem_limit = int(min(max(2 * E * tn * 2 + 2 * C * tn * 4 + fixed, 8 << 20),
                         (cap * 7) // 8))

    out = pl.pallas_call(
        _pool_apply_kernel,
        out_shape=jax.ShapeDtypeStruct((B, C, E_pad), fe.dtype),
        grid=(B, E_pad // tn),
        in_specs=[
            # fe block index constant in n -> DMA'd once per mesh, reused across
            # all column tiles.
            pl.BlockSpec((1, C, E), lambda b, n: (b, 0, 0)),
            pl.BlockSpec((1, E, tn), lambda b, n: (b, 0, n)),
        ],
        out_specs=pl.BlockSpec((1, C, tn), lambda b, n: (b, 0, n)),
        compiler_params=pltpu.CompilerParams(
            dimension_semantics=("parallel", "parallel"),
            vmem_limit_bytes=vmem_limit),
    )(fe_bf16, pmat)
    return out[:, :, :E] if E_pad != E else out


# ----------------------------------------------------------------------------
# Host-side glue: deterministic synthetic collapse indices from the ordering.
# TODO(synk): EdgeCollapse / mesh-topology mutation (do_able checks, anchor-face
# rejection, shrinking edge set, unpool inverses) has no Pallas equivalent; the
# quintuples below are a deterministic stand-in reproducing the pool_mat write
# pattern (identity + two columns of 3 ones per collapse).
# ----------------------------------------------------------------------------
def build_collapse_indices(order, E, target):
    n_collapse = min(target // 3, E // 5)
    idx = order[:, :5 * n_collapse].astype(jnp.int32)     # (B, 5*K)
    return idx, n_collapse


def build_pool_mats(collapse_idx, n_collapse, E):
    """Dense (B, E, E) pool matrices (f32; entries are exactly 0/1)."""
    def one_mesh(ci):
        pm = jnp.eye(E, dtype=jnp.float32)
        for k in range(n_collapse):
            ce, el, er = ci[5 * k + 0], ci[5 * k + 1], ci[5 * k + 2]
            dl, dr = ci[5 * k + 3], ci[5 * k + 4]
            left_pool = jnp.stack([el, dl, ce])
            right_pool = jnp.stack([er, dr, ce])
            pm = pm.at[left_pool, el].set(1.0)
            pm = pm.at[right_pool, er].set(1.0)
        return pm
    return jax.vmap(one_mesh)(collapse_idx)


# ----------------------------------------------------------------------------
# MeshPool forward ('norm' order).
# Returns (out_features, unpools, pool_weights) mirroring the PyTorch API.
# ----------------------------------------------------------------------------
def mesh_pool_forward(fe, target, *, use_sparse=True):
    B, C, E = fe.shape

    # 1) ordering scores (Pallas reduction kernel) + argsort (glue)
    scores = edge_sqnorm(fe)                         # (B, 1, E)
    order = jnp.argsort(scores[:, 0, :], axis=-1)    # ascending, like torch.argsort

    # 2) synthetic collapse indices (host glue standing in for topology walk)
    collapse_idx, n_collapse = build_collapse_indices(order, E, target)

    # 3) apply pooling + column normalization
    if n_collapse == 0:
        out_features = fe
    elif use_sparse:
        out_features = pool_apply_sparse(fe, collapse_idx, n_collapse)
    else:
        pool_mats = build_pool_mats(collapse_idx, n_collapse, E)
        out_features = pool_apply(fe, pool_mats)

    # TODO(synk): the original gathers only surviving edges per mesh and pads to
    # the max surviving count; without real topology all E columns are kept.
    assert out_features.shape[1] == fe.shape[1]
    unpools = {}        # TODO(synk): EdgeCollapse inverses are untranslatable
    pool_weights = {}
    return out_features, unpools, pool_weights


if __name__ == "__main__":
    key = jax.random.PRNGKey(0)
    B, C, E = 2, 8, 128
    target = 6  # pool target (=> 2 simulated collapses per mesh)

    fe = jax.random.normal(key, (B, C, E), dtype=jnp.float32)

    # default (sparse) path
    out_sparse, unpools, pool_weights = mesh_pool_forward(fe, target, use_sparse=True)
    out_sparse = jax.block_until_ready(out_sparse)

    # dense tiled-matmul path
    out_dense, _, _ = mesh_pool_forward(fe, target, use_sparse=False)
    out_dense = jax.block_until_ready(out_dense)

    # pure-JAX reference of the kernelized math
    scores_ref = jnp.sum(fe * fe, axis=1, keepdims=True)
    order_ref = jnp.argsort(scores_ref[:, 0, :], axis=-1)
    idx_ref, K = build_collapse_indices(order_ref, E, target)
    pm_ref = build_pool_mats(idx_ref, K, E)
    ref = jnp.einsum("bce,bef->bcf", fe, pm_ref) / jnp.sum(pm_ref, axis=1, keepdims=True)

    assert out_sparse.shape == (B, C, E)
    assert out_dense.shape == (B, C, E)
    # Sparse path is exact f32 arithmetic (identity columns bit-exact).
    assert jnp.allclose(out_sparse, ref, atol=1e-5, rtol=1e-5)
    # Dense path carries fe through bf16 (native MXU path per perf review);
    # ~2^-9 relative rounding on feature values.
    assert jnp.allclose(out_dense, ref, atol=2e-2, rtol=2e-2)

    print("KERNEL_OK")
</pallas_src>

<mosaic_0001>
module attributes {stable_mosaic.version = 11 : i64} {
  func.func @_edge_sqnorm_kernel(%arg0: memref<2x8x128xf32, #tpu.memory_space<vmem>>, %arg1: memref<2x1x128xf32, #tpu.memory_space<vmem>>) attributes {dimension_semantics = [], scalar_prefetch = 0 : i64, scratch_operands = 0 : i64, tpu.core_type = #tpu.core_type<tc>} {
    %c0 = arith.constant 0 : index
    %c0_0 = arith.constant 0 : index
    %c0_1 = arith.constant 0 : index
    %0 = vector.load %arg0[%c0, %c0_0, %c0_1] : memref<2x8x128xf32, #tpu.memory_space<vmem>>, vector<2x8x128xf32>
    %1 = arith.mulf %0, %0 : vector<2x8x128xf32>
    %cst = arith.constant dense<0.000000e+00> : vector<2x128xf32>
    %2 = vector.multi_reduction <add>, %1, %cst [1] : vector<2x8x128xf32> to vector<2x128xf32>
    %3 = vector.shape_cast %2 : vector<2x128xf32> to vector<2x1x128xf32>
    %c0_2 = arith.constant 0 : index
    %c0_3 = arith.constant 0 : index
    %c0_4 = arith.constant 0 : index
    %4 = vector.load %arg1[%c0_2, %c0_3, %c0_4] : memref<2x1x128xf32, #tpu.memory_space<vmem>>, vector<2x1x128xf32>
    tpu.vector_store %arg1[%c0_2, %c0_3, %c0_4], %3 {strides = array<i32>} : memref<2x1x128xf32, #tpu.memory_space<vmem>>, vector<2x1x128xf32>,
    return
  }
}

</mosaic_0001>

<llo_original>
// kernel: tpu_custom_call.1
$region0: #{tpu_custom_call.1}
  #allocation0 [shape = 'u32[]', space=smem, size = 0x4, offset = 0x4, fixed_abs, tag = 'smem constant byte address 0x4 - core index']
  #allocation1 [shape = 'u32[144,128]{1,0:T(1,128)}', space=vmem, size = 0x12000, scoped, tag = 'internal scratch']
  %s0 = inlined_call_operand.hbm [shape: f32[2,8,128], index: 0, kind: input, shape index: {}]
  %s1 = inlined_call_operand.hbm [shape: f32[2,1,128], index: 1, kind: output, shape index: {}]
  %s2 = sld [smem:[#allocation0]]
  $region18: #{tpu_custom_call.1} parent=0
    _
  %s4 = ssub.s32 1, %s2
  %s5 = scalar_select 0, %s4, %s2
  $region1: #{tpu_custom_call.1} parent=0
    #allocation2 [shape = 'u8[8192]{0}', space=vmem, size = 0x2000, scoped, tag = 'input window, operand 0, single buffered']
    #allocation3 [shape = 's32[1]{0}', space=sflag, size = 0x4, scoped, tag = 'scoped memory for tpu_custom_call.1']
    #allocation4 [shape = 's32[1]{0}', space=sflag, size = 0x4, scoped, tag = 'scoped memory for tpu_custom_call.1']
    #allocation5 [shape = 'u8[1024]{0}', space=vmem, size = 0x400, scoped, tag = 'output window, operand 0, single buffered']
    %6 = vsyncpa [#allocation3], 0
    %7 = vsyncpa [#allocation4], 0
    // Predicated region
    $region2: #{tpu_custom_call.1} parent=1 // pred_check
      _
    $region3: #{tpu_custom_call.1} parent=1 // pred_check_branch
      %9 = sbr.rel (0) target = $region5
    $region4: #{tpu_custom_call.1} parent=1 // pred_region
      %s11 = ssub.s32 256, 256
      %12 = vsyncadd [#allocation3], %s11
      %s13 = sshll.u32 [#allocation2], 4
      %s14 = int_to_ptr.vmem [resolvable:$true] %s13
      %19 = dma.hbm_to_vmem [thread:$0]  %s0, 256, %s14, [#allocation3], 128, 128, 8
    $region5: #{tpu_custom_call.1} parent=1 // pred_fallthru
      _
    // Predicated region
    $region6: #{tpu_custom_call.1} parent=1 // pred_check
      _
    $region7: #{tpu_custom_call.1} parent=1 // pred_check_branch
      %21 = sbr.rel (0) target = $region9
    $region8: #{tpu_custom_call.1} parent=1 // pred_region
      %22 = dma.done [#allocation3], 256
    $region9: #{tpu_custom_call.1} parent=1 // pred_fallthru
      _
    %v23 = vld [vmem:[#allocation2] sm:$0xff]
    %v24 = vld [vmem:[#allocation2 + $0x8] sm:$0xff]
    %v25 = vmul.f32 %v23, %v23
    %v26 = vmul.f32 %v24, %v24
    %v27 = vrot.slane %v25, 4
    %v28 = vadd.f32 %v25, %v27
    %v29 = vrot.slane %v28, 2
    %v30 = vadd.f32 %v28, %v29
    %v31 = vrot.slane %v30, 1
    %v32 = vadd.f32 %v30, %v31
    %v33 = vrot.slane %v26, 4
    %v34 = vadd.f32 %v26, %v33
    %v35 = vrot.slane %v34, 2
    %v36 = vadd.f32 %v34, %v35
    %v37 = vrot.slane %v36, 1
    %v38 = vadd.f32 %v36, %v37
    %39 = vst [vmem:[#allocation5] sm:$0x1] %v32
    %40 = vst [vmem:[#allocation5 + $0x1] sm:$0x1] %v38
    // Predicated region
    $region10: #{tpu_custom_call.1} parent=1 // pred_check
      _
    $region11: #{tpu_custom_call.1} parent=1 // pred_check_branch
      %42 = sbr.rel (0) target = $region13
    $region12: #{tpu_custom_call.1} parent=1 // pred_region
      %s44 = ssub.s32 32, 32
      %45 = vsyncadd [#allocation4], %s44
      %s46 = sshll.u32 [#allocation5], 4
      %s47 = int_to_ptr.vmem [resolvable:$true] %s46
      %52 = dma.vmem_to_hbm [thread:$0]  %s47, 32, %s1, [#allocation4], 16, 16, 1
    $region13: #{tpu_custom_call.1} parent=1 // pred_fallthru
      _
    // Predicated region
    $region14: #{tpu_custom_call.1} parent=1 // pred_check
      _
    $region15: #{tpu_custom_call.1} parent=1 // pred_check_branch
      %54 = sbr.rel (0) target = $region17
    $region16: #{tpu_custom_call.1} parent=1 // pred_region
      %55 = dma.done [#allocation4], 32
    $region17: #{tpu_custom_call.1} parent=1 // pred_fallthru
      _
    %56 = vsyncpa [#allocation3], 1
    %57 = vsyncpa [#allocation4], 1

</llo_original>
